<compile_context>
chip_gen: v6e
topology: v6e:2x2x1
jax: 0.10.0
libtpu: 0.0.40
codegen_flags: <defaults>
</compile_context>

<pallas_src>
import functools

import jax
import jax.numpy as jnp
from jax import lax
from jax.experimental import pallas as pl
from jax.experimental.pallas import tpu as pltpu


def _same_conv2d_kernel(x_ref, w_ref, o_ref, *, width, kh_total, pad_top, c_out):
    # x_ref: (1, C_in, H*W)        flattened (lane-dense) activations, one batch elem
    # w_ref: (KH*C_out, C_in)      kh-major stacked weights
    # o_ref: (1, C_out, H*W)
    x = x_ref[0]                                   # (C_in, HW) f32
    _, hw = x.shape

    # One MXU matmul for every tap at once: P[kh*C_out + c, l] = sum_ci w[c,ci,kh]*x[ci,l]
    p = jnp.dot(w_ref[...], x, preferred_element_type=jnp.float32)   # (KH*C_out, HW)

    # Lane index, used to zero the rows that fall in the top/bottom zero halo.
    lane = lax.broadcasted_iota(jnp.int32, (c_out, hw), 1)

    # Center tap (d == 0): no shift, no mask.
    acc = p[pad_top * c_out:(pad_top + 1) * c_out]                   # aligned 8-row view

    for kh in range(kh_total):
        d = kh - pad_top                            # H shift of this tap
        if d == 0:
            continue
        slab = p[kh * c_out:(kh + 1) * c_out]       # (C_out, HW), sublane-tile aligned
        # flattened H-shift == lane roll by d*W (XLU work, cheap slot)
        shifted = pltpu.roll(slab, shift=(-d * width) % hw, axis=1)
        if d < 0:
            valid = lane >= (-d) * width            # top zero-pad rows
        else:
            valid = lane < hw - d * width           # bottom zero-pad rows
        acc = acc + jnp.where(valid, shifted, 0.0)

    o_ref[0] = acc.astype(o_ref.dtype)


def same_con2d_pallas(x, weight, k_size=(4, 1), stride=(1, 1)):
    """x: (N, C_in, H, W) NCHW; weight: (C_out, C_in, KH, KW=1) (PyTorch layout)."""
    assert tuple(k_size) == (4, 1) and tuple(stride) == (1, 1)
    n, c_in, h, w = x.shape
    c_out, c_in_w, kh, kw = weight.shape
    assert c_in_w == c_in and kh == k_size[0] and kw == k_size[1]

    # ZeroPad2d(left=0, right=0, top=pad//2, bottom=pad - pad//2); pad = 3 -> (1, 2)
    up_bottom_pad = (k_size[0] - 1) // stride[0]
    pad_top = up_bottom_pad // 2                    # bottom pad implied by KH taps

    hw = h * w
    x_flat = x.reshape(n, c_in, hw)                 # free reshape (contiguous)

    # (C_out, C_in, KH, 1) -> (KH, C_out, C_in) -> (KH*C_out, C_in), kh-major
    w_stacked = jnp.transpose(weight[:, :, :, 0], (2, 0, 1)).reshape(kh * c_out, c_in)

    itemsize = x.dtype.itemsize
    cost = pl.CostEstimate(
        flops=2 * n * c_out * c_in * kh * hw,
        transcendentals=0,
        bytes_accessed=int(
            n * c_in * hw * itemsize + kh * c_out * c_in * itemsize
            + n * c_out * hw * itemsize
        ),
    )

    kernel = functools.partial(
        _same_conv2d_kernel, width=w, kh_total=kh, pad_top=pad_top, c_out=c_out
    )

    out_flat = pl.pallas_call(
        kernel,
        out_shape=jax.ShapeDtypeStruct((n, c_out, hw), x.dtype),
        grid_spec=pltpu.PrefetchScalarGridSpec(
            num_scalar_prefetch=0,
            grid=(n,),
            in_specs=[
                pl.BlockSpec((1, c_in, hw), lambda b: (b, 0, 0)),
                pl.BlockSpec((kh * c_out, c_in), lambda b: (0, 0)),
            ],
            out_specs=pl.BlockSpec((1, c_out, hw), lambda b: (b, 0, 0)),
        ),
        compiler_params=pltpu.CompilerParams(
            dimension_semantics=("parallel",),
        ),
        cost_estimate=cost,
    )(x_flat, w_stacked)

    return out_flat.reshape(n, c_out, h, w)         # free reshape back to NCHW


def _reference(x, weight):
    # pure-JAX reference of the PyTorch forward (ZeroPad2d(0,0,1,2) + VALID conv)
    x_pad = jnp.pad(x, ((0, 0), (0, 0), (1, 2), (0, 0)))
    return lax.conv_general_dilated(
        x_pad, weight, window_strides=(1, 1), padding="VALID",
        dimension_numbers=("NCHW", "OIHW", "NCHW"),
    )


if __name__ == "__main__":
    key = jax.random.PRNGKey(0)
    kx, kw = jax.random.split(key)

    N, C_IN, C_OUT, H, W = 2, 4, 8, 16, 16
    x = jax.random.normal(kx, (N, C_IN, H, W), dtype=jnp.float32)
    # deterministic weight init (Conv2d weight shape: (C_out, C_in, 4, 1))
    fan_in = C_IN * 4 * 1
    bound = 1.0 / jnp.sqrt(fan_in)
    weight = jax.random.uniform(
        kw, (C_OUT, C_IN, 4, 1), minval=-bound, maxval=bound, dtype=jnp.float32
    )

    out = same_con2d_pallas(x, weight)
    out = jax.block_until_ready(out)

    ref = _reference(x, weight)
    assert out.shape == (N, C_OUT, H, W)
    assert jnp.allclose(out, ref, atol=1e-5, rtol=1e-5)

    print("KERNEL_OK")
</pallas_src>

<mosaic_0001>
module attributes {stable_mosaic.version = 11 : i64} {
  func.func @_same_conv2d_kernel(%arg0: i32, %arg1: memref<1x4x256xf32, #tpu.memory_space<vmem>>, %arg2: memref<32x4xf32, #tpu.memory_space<vmem>>, %arg3: memref<1x8x256xf32, #tpu.memory_space<vmem>>) attributes {dimension_semantics = [#tpu.dimension_semantics<parallel>], iteration_bounds = array<i64: 2>, scalar_prefetch = 0 : i64, scratch_operands = 0 : i64, tpu.core_type = #tpu.core_type<tc>, window_params = [{transform_indices = @transform_0, window_bounds = array<i64: 1, 4, 256>}, {pipeline_mode = #tpu.pipeline_mode<synchronous>, transform_indices = @transform_1, window_bounds = array<i64: 32, 4>}, {transform_indices = @transform_2, window_bounds = array<i64: 1, 8, 256>}]} {
    %c0 = arith.constant 0 : index
    %c0_0 = arith.constant 0 : index
    %c0_1 = arith.constant 0 : index
    %0 = vector.load %arg1[%c0, %c0_0, %c0_1] : memref<1x4x256xf32, #tpu.memory_space<vmem>>, vector<1x4x256xf32>
    %1 = vector.shape_cast %0 : vector<1x4x256xf32> to vector<4x256xf32>
    %c0_2 = arith.constant 0 : index
    %c0_3 = arith.constant 0 : index
    %2 = vector.load %arg2[%c0_2, %c0_3] : memref<32x4xf32, #tpu.memory_space<vmem>>, vector<32x4xf32>
    %cst = arith.constant dense<0.000000e+00> : vector<32x256xf32>
    %3 = tpu.matmul %2, %1, %cst {dimension_numbers = #tpu.dot_dimension_numbers<[1], [0], [0], [1], [0, 0, 1, 1], [], []>} : vector<32x4xf32>, vector<4x256xf32>, vector<32x256xf32> -> vector<32x256xf32>
    %4 = tpu.iota {dimensions = array<i32: 1>} : vector<8x256xi32>
    %5 = vector.extract_strided_slice %3 {offsets = [8, 0], sizes = [8, 256], strides = [1, 1]} : vector<32x256xf32> to vector<8x256xf32>
    %6 = vector.extract_strided_slice %3 {offsets = [0, 0], sizes = [8, 256], strides = [1, 1]} : vector<32x256xf32> to vector<8x256xf32>
    %c16_i32 = arith.constant 16 : i32
    %7 = tpu.dynamic_rotate %6 by %c16_i32 dim 1 : vector<8x256xf32>, i32 -> vector<8x256xf32>
    %c16_i32_4 = arith.constant 16 : i32
    %8 = vector.broadcast %c16_i32_4 : i32 to vector<8x256xi32>
    %9 = arith.cmpi sge, %4, %8 : vector<8x256xi32>
    %cst_5 = arith.constant 0.000000e+00 : f32
    %10 = vector.broadcast %cst_5 : f32 to vector<8x256xf32>
    %11 = arith.select %9, %7, %10 : vector<8x256xi1>, vector<8x256xf32>
    %12 = arith.addf %5, %11 : vector<8x256xf32>
    %13 = vector.extract_strided_slice %3 {offsets = [16, 0], sizes = [8, 256], strides = [1, 1]} : vector<32x256xf32> to vector<8x256xf32>
    %c240_i32 = arith.constant 240 : i32
    %14 = tpu.dynamic_rotate %13 by %c240_i32 dim 1 : vector<8x256xf32>, i32 -> vector<8x256xf32>
    %c240_i32_6 = arith.constant 240 : i32
    %15 = vector.broadcast %c240_i32_6 : i32 to vector<8x256xi32>
    %16 = arith.cmpi slt, %4, %15 : vector<8x256xi32>
    %cst_7 = arith.constant 0.000000e+00 : f32
    %17 = vector.broadcast %cst_7 : f32 to vector<8x256xf32>
    %18 = arith.select %16, %14, %17 : vector<8x256xi1>, vector<8x256xf32>
    %19 = arith.addf %12, %18 : vector<8x256xf32>
    %20 = vector.extract_strided_slice %3 {offsets = [24, 0], sizes = [8, 256], strides = [1, 1]} : vector<32x256xf32> to vector<8x256xf32>
    %c224_i32 = arith.constant 224 : i32
    %21 = tpu.dynamic_rotate %20 by %c224_i32 dim 1 : vector<8x256xf32>, i32 -> vector<8x256xf32>
    %c224_i32_8 = arith.constant 224 : i32
    %22 = vector.broadcast %c224_i32_8 : i32 to vector<8x256xi32>
    %23 = arith.cmpi slt, %4, %22 : vector<8x256xi32>
    %cst_9 = arith.constant 0.000000e+00 : f32
    %24 = vector.broadcast %cst_9 : f32 to vector<8x256xf32>
    %25 = arith.select %23, %21, %24 : vector<8x256xi1>, vector<8x256xf32>
    %26 = arith.addf %19, %25 : vector<8x256xf32>
    %c0_10 = arith.constant 0 : index
    %c0_11 = arith.constant 0 : index
    %c0_12 = arith.constant 0 : index
    %27 = vector.load %arg3[%c0_10, %c0_11, %c0_12] : memref<1x8x256xf32, #tpu.memory_space<vmem>>, vector<1x8x256xf32>
    %28 = vector.shape_cast %27 : vector<1x8x256xf32> to vector<8x256xf32>
    %29 = vector.shape_cast %26 : vector<8x256xf32> to vector<1x8x256xf32>
    tpu.vector_store %arg3[%c0_10, %c0_11, %c0_12], %29 {strides = array<i32>} : memref<1x8x256xf32, #tpu.memory_space<vmem>>, vector<1x8x256xf32>,
    return
  }
  func.func @transform_0(%arg0: i32) -> (i32, i32, i32) {
    %c0_i32 = arith.constant 0 : i32
    %c0_i32_0 = arith.constant 0 : i32
    %c0_i32_1 = arith.constant 0 : i32
    return %arg0, %c0_i32, %c0_i32_0 : i32, i32, i32
  }
  func.func @transform_1(%arg0: i32) -> (i32, i32) {
    %c0_i32 = arith.constant 0 : i32
    %c0_i32_0 = arith.constant 0 : i32
    %c0_i32_1 = arith.constant 0 : i32
    return %c0_i32, %c0_i32_0 : i32, i32
  }
  func.func @transform_2(%arg0: i32) -> (i32, i32, i32) {
    %c0_i32 = arith.constant 0 : i32
    %c0_i32_0 = arith.constant 0 : i32
    %c0_i32_1 = arith.constant 0 : i32
    return %arg0, %c0_i32, %c0_i32_0 : i32, i32, i32
  }
}

</mosaic_0001>

<llo_original>
// kernel: tpu_custom_call.1
$region0: #{tpu_custom_call.1}
  #allocation0 [shape = 'u32[]', space=smem, size = 0x4, offset = 0x4, fixed_abs, tag = 'smem constant byte address 0x4 - core index']
  #allocation1 [shape = 'u32[144,128]{1,0:T(1,128)}', space=vmem, size = 0x12000, scoped, tag = 'internal scratch']
  %s0 = inlined_call_operand.vmem [shape: f32[2,4,256], index: 0, kind: input, shape index: {}]
  %s1 = inlined_call_operand.vmem [shape: f32[32,4], index: 1, kind: input, shape index: {}]
  %s2 = inlined_call_operand.hbm [shape: f32[2,8,256], index: 2, kind: output, shape index: {}]
  %s3 = sld [smem:[#allocation0]]
  $region41: #{tpu_custom_call.1} parent=0
    _
  %s5 = ssub.s32 1, %s3
  %s6 = scalar_select 0, %s5, %s3
  $region1: #{tpu_custom_call.1} parent=0
    #allocation2 [shape = 'u8[16384]{0}', space=vmem, size = 0x4000, scoped, tag = 'output window, operand 0']
    #allocation3 [shape = 's32[2]{0}', space=sflag, size = 0x8, scoped, tag = 'scoped memory for tpu_custom_call.1']
    %7 = vsyncpa [#allocation3], 0
    %s8 = scalar_lea.sflag [#allocation3], 1
    %9 = vsyncpa %s8, 0
    loop: start=0, step=1, limit=4
    $region2: #{tpu_custom_call.1} parent=1 // loop_pre_header
      _
    $region3: #{tpu_custom_call.1} parent=1 // loop_header
      %s11 = sphi 0, %s15
      %p12 = scmp.ge.s32.totalorder %s11, 4
      %s21 = sphi 0, %s23
      %s24 = sphi 0, %s21
      %s25 = sphi 0, %s24
      %s41 = sphi 0, %s25
      %s45 = sphi 0, %s45
      %s47 = sphi 0, %s45
      %s48 = sphi 0, %s47
      %s62 = sphi 0, %s48
      %s68 = sphi 0, %s70
      %s71 = sphi 0, %s68
      %s72 = sphi 0, %s71
      %s88 = sphi 0, %s72
    $region4: #{tpu_custom_call.1} parent=1 // loop_header_branch
      %14 = sbr.rel (%p12) target = $region8
    $region5: #{tpu_custom_call.1} parent=1 // loop_body
      %s16 = ssub.s32 %s11, 1
      %s17 = ssub.s32 %s11, 2
      %s18 = sadd.s32 %s11, 1
      %s19 = ssub.s32 %s11, %s18
      %p20 = scmp.eq.s32.totalorder %s19, 0
      %s22 = sadd.s32 %s21, 1
      %s23 = scalar_select %p20, %s21, %s22
      %p26 = pneg %p20
      %p27 = scmp.eq.s32.totalorder %s11, 1
      %p28 = por %p26, %p27
      %p29 = scmp.ne.s32.totalorder %s21, %s24
      %p30 = scmp.eq.s32.totalorder %s11, 0
      %p31 = por %p29, %p30
      %p32 = scmp.ne.s32.totalorder %s21, %s24
      %p33 = scmp.eq.s32.totalorder %s16, 1
      %p34 = por %p32, %p33
      %p35 = scmp.ne.s32.totalorder %s24, %s25
      %p36 = scmp.eq.s32.totalorder %s16, 0
      %p37 = por %p35, %p36
      %p38 = scmp.ne.s32.totalorder %s24, %s25
      %p39 = scmp.eq.s32.totalorder %s17, 1
      %p40 = por %p38, %p39
      %p42 = scmp.ne.s32.totalorder %s25, %s41
      %p43 = scmp.eq.s32.totalorder %s17, 0
      %p44 = por %p42, %p43
      %s46 = sadd.s32 %s45, 1
      %p49 = scmp.eq.s32.totalorder %s11, 1
      %p50 = scmp.ne.s32.totalorder %s45, %s47
      %p51 = scmp.eq.s32.totalorder %s11, 0
      %p52 = por %p50, %p51
      %p53 = scmp.ne.s32.totalorder %s45, %s47
      %p54 = scmp.eq.s32.totalorder %s16, 1
      %p55 = por %p53, %p54
      %p56 = scmp.ne.s32.totalorder %s47, %s48
      %p57 = scmp.eq.s32.totalorder %s16, 0
      %p58 = por %p56, %p57
      %p59 = scmp.ne.s32.totalorder %s47, %s48
      %p60 = scmp.eq.s32.totalorder %s17, 1
      %p61 = por %p59, %p60
      %p63 = scmp.ne.s32.totalorder %s48, %s62
      %p64 = scmp.eq.s32.totalorder %s17, 0
      %p65 = por %p63, %p64
      %s66 = ssub.s32 %s11, %s18
      %p67 = scmp.eq.s32.totalorder %s66, 0
      %s69 = sadd.s32 %s68, 1
      %s70 = scalar_select %p67, %s68, %s69
      %p73 = pneg %p67
      %p74 = scmp.eq.s32.totalorder %s11, 1
      %p75 = por %p73, %p74
      %p76 = scmp.ne.s32.totalorder %s68, %s71
      %p77 = scmp.eq.s32.totalorder %s11, 0
      %p78 = por %p76, %p77
      %p79 = scmp.ne.s32.totalorder %s68, %s71
      %p80 = scmp.eq.s32.totalorder %s16, 1
      %p81 = por %p79, %p80
      %p82 = scmp.ne.s32.totalorder %s71, %s72
      %p83 = scmp.eq.s32.totalorder %s16, 0
      %p84 = por %p82, %p83
      %p85 = scmp.ne.s32.totalorder %s71, %s72
      %p86 = scmp.eq.s32.totalorder %s17, 1
      %p87 = por %p85, %p86
      %p89 = scmp.ne.s32.totalorder %s72, %s88
      %p90 = scmp.eq.s32.totalorder %s17, 0
      %p91 = por %p89, %p90
      %p92 = scmp.le.s32.totalorder 1, %s11
      %p93 = scmp.lt.s32.totalorder %s11, 3
      %p94 = pnand %p92, %p93
      %p95 = pneg %p94
      // Predicated region
      $region9: #{tpu_custom_call.1} parent=5 // pred_check
        _
      $region10: #{tpu_custom_call.1} parent=5 // pred_check_branch
        %97 = sbr.rel (%p94) target = $region12
      $region11: #{tpu_custom_call.1} parent=5 // pred_region
        %s98 = ssub.s32 %s11, 1
        // Predicated region
        $region13: #{tpu_custom_call.1} parent=11 // pred_check
          %p99 = pneg %p58
        $region14: #{tpu_custom_call.1} parent=11 // pred_check_branch
          %101 = sbr.rel (%p99) target = $region16
        $region15: #{tpu_custom_call.1} parent=11 // pred_region
          _
        $region16: #{tpu_custom_call.1} parent=11 // pred_fallthru
          _
      $region12: #{tpu_custom_call.1} parent=5 // pred_fallthru
        _
      %p102 = scmp.lt.s32.totalorder %s11, 2
      // Predicated region
      $region17: #{tpu_custom_call.1} parent=5 // pred_check
        %p103 = pneg %p102
      $region18: #{tpu_custom_call.1} parent=5 // pred_check_branch
        %105 = sbr.rel (%p103) target = $region20
      $region19: #{tpu_custom_call.1} parent=5 // pred_region
        // Predicated region
        $region21: #{tpu_custom_call.1} parent=19 // pred_check
          %p106 = pneg %p31
        $region22: #{tpu_custom_call.1} parent=19 // pred_check_branch
          %108 = sbr.rel (%p106) target = $region24
        $region23: #{tpu_custom_call.1} parent=19 // pred_region
          %p109 = scmp.lt.s32.totalorder %s11, 1
          %s110 = scalar_select %p109, %s11, 1
          %s111 = smul.addr %s110, 2
          %s112 = smul.addr %s111, 4
          %s113 = scalar_lea.vmem %s0, %s112
        $region24: #{tpu_custom_call.1} parent=19 // pred_fallthru
          _
      $region20: #{tpu_custom_call.1} parent=5 // pred_fallthru
        _
      %p114 = scmp.le.s32.totalorder 1, %s11
      %p115 = scmp.lt.s32.totalorder %s11, 3
      %p116 = pnand %p114, %p115
      %p117 = pneg %p116
      // Predicated region
      $region25: #{tpu_custom_call.1} parent=5 // pred_check
        _
      $region26: #{tpu_custom_call.1} parent=5 // pred_check_branch
        %119 = sbr.rel (%p116) target = $region28
      $region27: #{tpu_custom_call.1} parent=5 // pred_region
        %s120 = ssub.s32 %s11, 1
        %p121 = scmp.lt.s32.totalorder %s16, 1
        %s122 = scalar_select %p121, %s16, 1
        %s123 = smul.addr %s122, 2
        %s124 = smul.addr %s123, 4
        %s125 = scalar_lea.vmem %s0, %s124
        %p126 = pneg %p37
        %p127 = pneg %p34
        %p128 = pneg %p58
        %p129 = pneg %p55
        %p130 = pneg %p84
        %p131 = pneg %p81
        %s132 = sand.u32 %s71, 1
        %s133 = scalar_lea.sflag [#allocation3], %s132
        %s134 = sand.u32 %s71, 1
        %s135 = smul.addr %s134, 16
        %s136 = scalar_lea.vmem [#allocation2], %s135
        %p137 = scmp.lt.s32.totalorder %s16, 1
        %s138 = scalar_select %p137, %s16, 1
        %s139 = smul.addr %s138, 2
        %s140 = smul.addr %s139, 4
        %s141 = scalar_lea.vmem %s0, %s140
        %v142 = vld [vmem:[%s141] sm:$0xff]
        %v143 = vld [vmem:[%s1] sm:$0xff]
        %v144 = vld [vmem:[%s1 + $0x8] sm:$0xff]
        %v145 = vld [vmem:[%s1 + $0x10] sm:$0xff]
        %v146 = vld [vmem:[%s1 + $0x18] sm:$0xff]
        %v148 = vcombine.high %v142, %v142
        %vm149 = vcmask 31744
        %v151 = vsel %vm149, %v143, 0
        %v154 = vsel %vm149, %v144, 0
        %v157 = vsel %vm149, %v145, 0
        %v160 = vsel %vm149, %v146, 0
        %vm162 = vcmask 1043456
        %v163 = vsel %vm162, %v142, 0
        %v165 = vsel %vm162, %v148, 0
        %167 = vmatprep.subr.mxu0 0.0
        %168 = vmatpush1.msra.mxu0 0.0
        %169 = vmatprep.subr.mxu0 0.0
        %170 = vmatpush1.msra.mxu0 0.0
        %171 = vmatprep.subr.mxu0 0.0
        %172 = vmatpush1.msra.mxu0 0.0
        %173 = vmatprep.subr.mxu0 0.0
        %174 = vmatpush1.msra.mxu0 0.0
        %175 = vmatprep.subr.mxu0 0.0
        %176 = vmatpush1.msra.mxu0 0.0
        %177 = vmatprep.subr.mxu0 0.0
        %178 = vmatpush1.msra.mxu0 0.0
        %179 = vmatprep.subr.mxu0 0.0
        %180 = vmatpush1.msra.mxu0 0.0
        %181 = vmatprep.subr.mxu0 0.0
        %182 = vmatpush1.msra.mxu0 0.0
        %183 = vmatprep.subr.mxu0 0.0
        %184 = vmatpush1.msra.mxu0 0.0
        %185 = vmatprep.subr.mxu0 0.0
        %186 = vmatpush1.msra.mxu0 0.0
        %187 = vmatprep.subr.mxu0 0.0
        %188 = vmatpush1.msra.mxu0 0.0
        %189 = vmatprep.subr.mxu0 0.0
        %190 = vmatpush1.msra.mxu0 0.0
        %191 = vmatprep.subr.mxu0 0.0
        %192 = vmatpush1.msra.mxu0 0.0
        %193 = vmatprep.subr.mxu0 0.0
        %194 = vmatpush1.msra.mxu0 0.0
        %195 = vmatprep.subr.mxu0 0.0
        %196 = vmatpush1.msra.mxu0 0.0
        %197 = vmatprep.subr.mxu0 %v165
        %198 = vmatpush1.msra.mxu0 %v163
        %199 = vmatprep.subr.mxu0 0.0
        %200 = vmatpush2.msra.mxu0 0.0
        %201 = vmatprep.subr.mxu0 0.0
        %202 = vmatpush2.msra.mxu0 0.0
        %203 = vmatprep.subr.mxu0 0.0
        %204 = vmatpush2.msra.mxu0 0.0
        %205 = vmatprep.subr.mxu0 0.0
        %206 = vmatpush2.msra.mxu0 0.0
        %207 = vmatprep.subr.mxu0 0.0
        %208 = vmatpush2.msra.mxu0 0.0
        %209 = vmatprep.subr.mxu0 0.0
        %210 = vmatpush2.msra.mxu0 0.0
        %211 = vmatprep.subr.mxu0 0.0
        %212 = vmatpush2.msra.mxu0 0.0
        %213 = vmatprep.subr.mxu0 0.0
        %214 = vmatpush2.msra.mxu0 0.0
        %215 = vmatprep.subr.mxu0 0.0
        %216 = vmatpush2.msra.mxu0 0.0
        %217 = vmatprep.subr.mxu0 0.0
        %218 = vmatpush2.msra.mxu0 0.0
        %219 = vmatprep.subr.mxu0 0.0
        %220 = vmatpush2.msra.mxu0 0.0
        %221 = vmatprep.subr.mxu0 0.0
        %222 = vmatpush2.msra.mxu0 0.0
        %223 = vmatprep.subr.mxu0 0.0
        %224 = vmatpush2.msra.mxu0 0.0
        %225 = vmatprep.subr.mxu0 0.0
        %226 = vmatpush2.msra.mxu0 0.0
        %227 = vmatprep.subr.mxu0 0.0
        %228 = vmatpush2.msra.mxu0 0.0
        %229 = vmatprep.subr.mxu0 0.0
        %230 = vmatpush2.msra.mxu0 0.0
        %231 = vmatprep.mubr.f32.mxu0 0.0
        %232 = vmatmul.mubr.f32.gmra.mxu0 %v151
        %v233 = vpop.f32.mrf.mxu0
        %v234 = vadd.f32 0.0, %v233
        %v235 = vpop.f32.mrf.mxu0
        %v236 = vadd.f32 0.0, %v235
        %237 = vmatprep.mubr.f32.mxu0 0.0
        %238 = vmatmul.mubr.f32.gmra.mxu0 %v154
        %v239 = vpop.f32.mrf.mxu0
        %v240 = vadd.f32 0.0, %v239
        %v241 = vpop.f32.mrf.mxu0
        %v242 = vadd.f32 0.0, %v241
        %243 = vmatprep.mubr.f32.mxu0 0.0
        %244 = vmatmul.mubr.f32.gmra.mxu0 %v157
        %v245 = vpop.f32.mrf.mxu0
        %v246 = vadd.f32 0.0, %v245
        %v247 = vpop.f32.mrf.mxu0
        %v248 = vadd.f32 0.0, %v247
        %249 = vmatprep.mubr.f32.mxu0 0.0
        %250 = vmatmul.mubr.f32.gmra.mxu0 %v160
        %v251 = vpop.f32.mrf.mxu0
        %v252 = vadd.f32 0.0, %v251
        %v253 = vpop.f32.mrf.mxu0
        %v254 = vadd.f32 0.0, %v253
        %255 = vdwg.mxu0
        %v256 = vlaneseq
        %v257 = vand.u32 %v256, 127
        %v258 = vadd.s32 %v257, 128
        %259 = vrot.lane.b32.xlu0 %v234, 16
        %v260 = vpop.permute.xlu0 %259
        %261 = vrot.lane.b32.xlu0 %v236, 16
        %v262 = vpop.permute.xlu0 %261
        %vm263 = vcmp.lt.s32.totalorder %v257, 16
        %v264 = vsel %vm263, %v260, %v262
        %v265 = vsel %vm263, %v262, %v260
        %vm266 = vcmp.ge.s32.totalorder %v257, 16
        %vm267 = vcmp.ge.s32.totalorder %v258, 16
        %v268 = vsel %vm266, %v265, 0.0
        %v269 = vsel %vm267, %v264, 0.0
        %v270 = vadd.f32 %v240, %v268
        %v271 = vadd.f32 %v242, %v269
        %272 = vrot.lane.b32.xlu0 %v246, 112
        %v273 = vpop.permute.xlu0 %272
        %274 = vrot.lane.b32.xlu0 %v248, 112
        %v275 = vpop.permute.xlu0 %274
        %vm276 = vcmp.lt.s32.totalorder %v257, 112
        %v277 = vsel %vm276, %v273, %v275
        %v278 = vsel %vm276, %v275, %v273
        %vm279 = vcmp.lt.s32.totalorder %v257, 240
        %vm280 = vcmp.lt.s32.totalorder %v258, 240
        %v281 = vsel %vm279, %v277, 0.0
        %v282 = vsel %vm280, %v278, 0.0
        %v283 = vadd.f32 %v270, %v281
        %v284 = vadd.f32 %v271, %v282
        %285 = vrot.lane.b32.xlu0 %v252, 96
        %v286 = vpop.permute.xlu0 %285
        %287 = vrot.lane.b32.xlu0 %v254, 96
        %v288 = vpop.permute.xlu0 %287
        %vm289 = vcmp.lt.s32.totalorder %v257, 96
        %v290 = vsel %vm289, %v286, %v288
        %v291 = vsel %vm289, %v288, %v286
        %vm292 = vcmp.lt.s32.totalorder %v257, 224
        %vm293 = vcmp.lt.s32.totalorder %v258, 224
        %v294 = vsel %vm292, %v290, 0.0
        %v295 = vsel %vm293, %v291, 0.0
        %v296 = vadd.f32 %v283, %v294
        %v297 = vadd.f32 %v284, %v295
        %298 = vst [vmem:[%s136] sm:$0xff] %v296
        %299 = vst [vmem:[%s136 + $0x8] sm:$0xff] %v297
        %s300 = sand.u32 %s71, 1
        %s301 = scalar_lea.sflag [#allocation3], %s300
        %s302 = sand.u32 %s71, 1
        %s303 = smul.addr %s302, 16
        %s304 = scalar_lea.vmem [#allocation2], %s303
        // Predicated region
        $region29: #{tpu_custom_call.1} parent=27 // pred_check
          %p305 = pneg %p81
        $region30: #{tpu_custom_call.1} parent=27 // pred_check_branch
          %307 = sbr.rel (%p305) target = $region32
        $region31: #{tpu_custom_call.1} parent=27 // pred_region
          %s309 = ssub.s32 256, 256
          %310 = vsyncadd %s301, %s309
          %s311 = smul.addr %s16, 2
          %s312 = smul.addr %s311, 128
          %s313 = scalar_lea.hbm %s2, %s312
          %s315 = sshll.u32 %s304, 4
          %s316 = int_to_ptr.vmem [resolvable:$true] %s315
          %318 = dma.vmem_to_hbm [thread:$0]  %s316, 256, %s313, %s301
        $region32: #{tpu_custom_call.1} parent=27 // pred_fallthru
          _
      $region28: #{tpu_custom_call.1} parent=5 // pred_fallthru
        _
      %p319 = scmp.le.s32.totalorder 2, %s11
      // Predicated region
      $region33: #{tpu_custom_call.1} parent=5 // pred_check
        %p320 = pneg %p319
      $region34: #{tpu_custom_call.1} parent=5 // pred_check_branch
        %322 = sbr.rel (%p320) target = $region36
      $region35: #{tpu_custom_call.1} parent=5 // pred_region
        %s323 = ssub.s32 %s11, 2
        // Predicated region
        $region37: #{tpu_custom_call.1} parent=35 // pred_check
          %p324 = pneg %p87
        $region38: #{tpu_custom_call.1} parent=35 // pred_check_branch
          %326 = sbr.rel (%p324) target = $region40
        $region39: #{tpu_custom_call.1} parent=35 // pred_region
          %s327 = sand.u32 %s72, 1
          %s328 = scalar_lea.sflag [#allocation3], %s327
          %s329 = sand.u32 %s72, 1
          %s330 = smul.addr %s329, 16
          %s331 = scalar_lea.vmem [#allocation2], %s330
          %332 = dma.done %s328, 256
        $region40: #{tpu_custom_call.1} parent=35 // pred_fallthru
          _
      $region36: #{tpu_custom_call.1} parent=5 // pred_fallthru
        _
    $region6: #{tpu_custom_call.1} parent=1 // loop_footer
      %s15 = sadd.s32 1, %s11
    $region7: #{tpu_custom_call.1} parent=1 // loop_footer_branch
      %10 = sbr.rel target = $region3
    $region8: #{tpu_custom_call.1} parent=1 // loop_exit
      _
    %333 = vsyncpa [#allocation3], 1
    %s334 = scalar_lea.sflag [#allocation3], 1
    %335 = vsyncpa %s334, 1

</llo_original>
